<compile_context>
chip_gen: v5e
topology: v5e:2x2
jax: 0.10.0
libtpu: 0.0.40
codegen_flags: <defaults>
</compile_context>

<pallas_src>
import jax
import jax.numpy as jnp
from jax.experimental import pallas as pl
from jax.experimental.pallas import tpu as pltpu

KH = KW = 20
C_IN = 1
C_OUT = 8


def _round_up(x, m):
    return (x + m - 1) // m * m


def conv_tanh_kernel(w_ref, p_ref, b_ref, o_ref):
    # w_ref: (C_OUT, K_pad)  f32 conv weights, taps flattened (cin, kh, kw), zero-padded
    # p_ref: (K_pad, M_pad)  f32 im2col patches (same tap order), zero-padded
    # b_ref: (C_OUT, 1)      f32 bias
    # o_ref: (C_OUT, M_pad)  f32 output, lane-dense (M_pad is a multiple of 128)
    acc = jnp.dot(w_ref[...], p_ref[...], preferred_element_type=jnp.float32)
    o_ref[...] = jnp.tanh(acc + b_ref[...])


@jax.jit
def conv2d_tanh(x, weight, bias):
    """x: (N, 1, H, W) NCHW; weight: (8, 1, 20, 20) OIHW; bias: (8,)."""
    n, cin, h, w = x.shape
    assert cin == C_IN
    ho, wo = h - KH + 1, w - KW + 1

    k = cin * KH * KW                 # 400
    m = n * ho * wo
    k_pad = _round_up(k, 128)         # 512
    m_pad = _round_up(max(m, 128), 128)

    # Wrapper-side im2col (pure data movement).  Output feature ordering is
    # (cin, kh, kw) row-major -> matches weight.reshape(C_OUT, cin*KH*KW).
    patches = jax.lax.conv_general_dilated_patches(
        x.astype(jnp.float32), (KH, KW), (1, 1), "VALID",
        dimension_numbers=("NCHW", "OIHW", "NCHW"))          # (N, K, Ho, Wo)
    patches = jnp.transpose(patches, (1, 0, 2, 3)).reshape(k, m)
    patches = jnp.pad(patches, ((0, k_pad - k), (0, m_pad - m)))  # (K_pad, M_pad)

    wk = weight.astype(jnp.float32).reshape(C_OUT, k)
    wk = jnp.pad(wk, ((0, 0), (0, k_pad - k)))               # (C_OUT, K_pad)
    bk = bias.astype(jnp.float32).reshape(C_OUT, 1)           # (C_OUT, 1)

    out = pl.pallas_call(
        conv_tanh_kernel,
        out_shape=jax.ShapeDtypeStruct((C_OUT, m_pad), jnp.float32),
        in_specs=[
            pl.BlockSpec(memory_space=pltpu.MemorySpace.VMEM),
            pl.BlockSpec(memory_space=pltpu.MemorySpace.VMEM),
            pl.BlockSpec(memory_space=pltpu.MemorySpace.VMEM),
        ],
        out_specs=pl.BlockSpec(memory_space=pltpu.MemorySpace.VMEM),
    )(wk, patches, bk)

    # Drop padding and restore NCHW (free XLA reshape/transpose).
    out = out[:, :m].reshape(C_OUT, n, ho, wo)
    return jnp.transpose(out, (1, 0, 2, 3))                   # (N, C_OUT, Ho, Wo)


if __name__ == "__main__":
    key = jax.random.PRNGKey(0)
    kx, kw_key, kb_key = jax.random.split(key, 3)

    # Conv2d(1, 8, 20) needs H, W >= 20 (the module's sample (1,1,9216,4) is
    # invalid for a 20x20 kernel), so use a small valid spatial size.
    N, H, W = 2, 32, 32
    x = jax.random.normal(kx, (N, 1, H, W), dtype=jnp.float32)
    weight = jax.random.normal(kw_key, (C_OUT, 1, KH, KW), dtype=jnp.float32) * 0.05
    bias = jax.random.normal(kb_key, (C_OUT,), dtype=jnp.float32) * 0.05

    y = jax.block_until_ready(conv2d_tanh(x, weight, bias))
    assert y.shape == (N, C_OUT, H - KH + 1, W - KW + 1), y.shape

    # Reference: XLA conv + tanh.
    ref = jax.lax.conv_general_dilated(
        x, weight, (1, 1), "VALID",
        dimension_numbers=("NCHW", "OIHW", "NCHW"))
    ref = jnp.tanh(ref + bias.reshape(1, C_OUT, 1, 1))
    assert jnp.allclose(y, ref, atol=1e-3, rtol=1e-3), \
        float(jnp.max(jnp.abs(y - ref)))

    print("KERNEL_OK")
</pallas_src>

<mosaic_0001>
module attributes {stable_mosaic.version = 11 : i64} {
  func.func @conv_tanh_kernel(%arg0: memref<8x512xf32, #tpu.memory_space<vmem>>, %arg1: memref<512x384xf32, #tpu.memory_space<vmem>>, %arg2: memref<8x1xf32, #tpu.memory_space<vmem>>, %arg3: memref<8x384xf32, #tpu.memory_space<vmem>>) attributes {dimension_semantics = [], scalar_prefetch = 0 : i64, scratch_operands = 0 : i64, tpu.core_type = #tpu.core_type<tc>} {
    %c0 = arith.constant 0 : index
    %c0_0 = arith.constant 0 : index
    %0 = vector.load %arg0[%c0, %c0_0] : memref<8x512xf32, #tpu.memory_space<vmem>>, vector<8x512xf32>
    %c0_1 = arith.constant 0 : index
    %c0_2 = arith.constant 0 : index
    %1 = vector.load %arg1[%c0_1, %c0_2] : memref<512x384xf32, #tpu.memory_space<vmem>>, vector<512x384xf32>
    %cst = arith.constant dense<0.000000e+00> : vector<8x384xf32>
    %2 = tpu.matmul %0, %1, %cst {dimension_numbers = #tpu.dot_dimension_numbers<[1], [0], [0], [1], [0, 0, 1, 1], [], []>} : vector<8x512xf32>, vector<512x384xf32>, vector<8x384xf32> -> vector<8x384xf32>
    %c0_3 = arith.constant 0 : index
    %c0_4 = arith.constant 0 : index
    %3 = vector.load %arg2[%c0_3, %c0_4] : memref<8x1xf32, #tpu.memory_space<vmem>>, vector<8x1xf32>
    %4 = vector.broadcast %3 : vector<8x1xf32> to vector<8x384xf32>
    %5 = arith.addf %2, %4 : vector<8x384xf32>
    %6 = math.tanh %5 : vector<8x384xf32>
    %c0_5 = arith.constant 0 : index
    %c0_6 = arith.constant 0 : index
    %7 = vector.load %arg3[%c0_5, %c0_6] : memref<8x384xf32, #tpu.memory_space<vmem>>, vector<8x384xf32>
    tpu.vector_store %arg3[%c0_5, %c0_6], %6 {strides = array<i32>} : memref<8x384xf32, #tpu.memory_space<vmem>>, vector<8x384xf32>,
    return
  }
}

</mosaic_0001>

<llo_original>
// kernel: conv2d_tanh.1
$region0: #{conv2d_tanh.1}
  #allocation0 [shape = 'u32[]', space=smem, size = 0x4, offset = 0x4, fixed_abs, tag = 'smem constant byte address 0x4 - core index']
  #allocation1 [shape = 'u32[72,128]{1,0:T(1,128)}', space=vmem, size = 0x9000, scoped, tag = 'internal scratch']
  %s0 = inlined_call_operand.vmem [shape: f32[8,512], index: 0, kind: input, shape index: {}]
  %s1 = inlined_call_operand.vmem [shape: f32[512,384], index: 1, kind: input, shape index: {}]
  %s2 = inlined_call_operand.vmem [shape: f32[8,1], index: 2, kind: input, shape index: {}]
  %s3 = inlined_call_operand.vmem [shape: f32[8,384], index: 3, kind: output, shape index: {}]
  %s4 = sld [smem:[#allocation0]]
  $region22: #{conv2d_tanh.1} parent=0
    _
  %s6 = ssub.s32 1, %s4
  %s7 = scalar_select 0, %s6, %s4
  // Predicated region
  $region2: #{conv2d_tanh.1} parent=0 // pred_check
    _
  $region3: #{conv2d_tanh.1} parent=0 // pred_check_branch
    %9 = sbr.rel (0) target = $region5
  $region4: #{conv2d_tanh.1} parent=0 // pred_region
    _
  $region5: #{conv2d_tanh.1} parent=0 // pred_fallthru
    _
  // Predicated region
  $region6: #{conv2d_tanh.1} parent=0 // pred_check
    _
  $region7: #{conv2d_tanh.1} parent=0 // pred_check_branch
    %11 = sbr.rel (0) target = $region9
  $region8: #{conv2d_tanh.1} parent=0 // pred_region
    _
  $region9: #{conv2d_tanh.1} parent=0 // pred_fallthru
    _
  // Predicated region
  $region10: #{conv2d_tanh.1} parent=0 // pred_check
    _
  $region11: #{conv2d_tanh.1} parent=0 // pred_check_branch
    %13 = sbr.rel (0) target = $region13
  $region12: #{conv2d_tanh.1} parent=0 // pred_region
    _
  $region13: #{conv2d_tanh.1} parent=0 // pred_fallthru
    _
  %v14 = vld [vmem:[%s0] sm:$0xff]
  %v15 = vld [vmem:[%s0 + $0x8] sm:$0xff]
  %v16 = vld [vmem:[%s0 + $0x10] sm:$0xff]
  %v17 = vld [vmem:[%s0 + $0x18] sm:$0xff]
  %v18 = vld [vmem:[%s1] sm:$0xff]
  %v19 = vld [vmem:[%s1 + $0x8] sm:$0xff]
  %v20 = vld [vmem:[%s1 + $0x10] sm:$0xff]
  %v21 = vld [vmem:[%s1 + $0x18] sm:$0xff]
  %v22 = vld [vmem:[%s1 + $0x20] sm:$0xff]
  %v23 = vld [vmem:[%s1 + $0x28] sm:$0xff]
  %v24 = vld [vmem:[%s1 + $0x30] sm:$0xff]
  %v25 = vld [vmem:[%s1 + $0x38] sm:$0xff]
  %v26 = vld [vmem:[%s1 + $0x40] sm:$0xff]
  %v27 = vld [vmem:[%s1 + $0x48] sm:$0xff]
  %v28 = vld [vmem:[%s1 + $0x50] sm:$0xff]
  %v29 = vld [vmem:[%s1 + $0x58] sm:$0xff]
  %v30 = vld [vmem:[%s1 + $0x60] sm:$0xff]
  %v31 = vld [vmem:[%s1 + $0x68] sm:$0xff]
  %v32 = vld [vmem:[%s1 + $0x70] sm:$0xff]
  %v33 = vld [vmem:[%s1 + $0x78] sm:$0xff]
  %v34 = vld [vmem:[%s1 + $0x80] sm:$0xff]
  %v35 = vld [vmem:[%s1 + $0x88] sm:$0xff]
  %v36 = vld [vmem:[%s1 + $0x90] sm:$0xff]
  %v37 = vld [vmem:[%s1 + $0x98] sm:$0xff]
  %v38 = vld [vmem:[%s1 + $0xa0] sm:$0xff]
  %v39 = vld [vmem:[%s1 + $0xa8] sm:$0xff]
  %v40 = vld [vmem:[%s1 + $0xb0] sm:$0xff]
  %v41 = vld [vmem:[%s1 + $0xb8] sm:$0xff]
  %v42 = vld [vmem:[%s1 + $0xc0] sm:$0xff]
  %v43 = vld [vmem:[%s1 + $0xc8] sm:$0xff]
  %v44 = vld [vmem:[%s1 + $0xd0] sm:$0xff]
  %v45 = vld [vmem:[%s1 + $0xd8] sm:$0xff]
  %v46 = vld [vmem:[%s1 + $0xe0] sm:$0xff]
  %v47 = vld [vmem:[%s1 + $0xe8] sm:$0xff]
  %v48 = vld [vmem:[%s1 + $0xf0] sm:$0xff]
  %v49 = vld [vmem:[%s1 + $0xf8] sm:$0xff]
  %v50 = vld [vmem:[%s1 + $0x100] sm:$0xff]
  %v51 = vld [vmem:[%s1 + $0x108] sm:$0xff]
  %v52 = vld [vmem:[%s1 + $0x110] sm:$0xff]
  %v53 = vld [vmem:[%s1 + $0x118] sm:$0xff]
  %v54 = vld [vmem:[%s1 + $0x120] sm:$0xff]
  %v55 = vld [vmem:[%s1 + $0x128] sm:$0xff]
  %v56 = vld [vmem:[%s1 + $0x130] sm:$0xff]
  %v57 = vld [vmem:[%s1 + $0x138] sm:$0xff]
  %v58 = vld [vmem:[%s1 + $0x140] sm:$0xff]
  %v59 = vld [vmem:[%s1 + $0x148] sm:$0xff]
  %v60 = vld [vmem:[%s1 + $0x150] sm:$0xff]
  %v61 = vld [vmem:[%s1 + $0x158] sm:$0xff]
  %v62 = vld [vmem:[%s1 + $0x160] sm:$0xff]
  %v63 = vld [vmem:[%s1 + $0x168] sm:$0xff]
  %v64 = vld [vmem:[%s1 + $0x170] sm:$0xff]
  %v65 = vld [vmem:[%s1 + $0x178] sm:$0xff]
  %v66 = vld [vmem:[%s1 + $0x180] sm:$0xff]
  %v67 = vld [vmem:[%s1 + $0x188] sm:$0xff]
  %v68 = vld [vmem:[%s1 + $0x190] sm:$0xff]
  %v69 = vld [vmem:[%s1 + $0x198] sm:$0xff]
  %v70 = vld [vmem:[%s1 + $0x1a0] sm:$0xff]
  %v71 = vld [vmem:[%s1 + $0x1a8] sm:$0xff]
  %v72 = vld [vmem:[%s1 + $0x1b0] sm:$0xff]
  %v73 = vld [vmem:[%s1 + $0x1b8] sm:$0xff]
  %v74 = vld [vmem:[%s1 + $0x1c0] sm:$0xff]
  %v75 = vld [vmem:[%s1 + $0x1c8] sm:$0xff]
  %v76 = vld [vmem:[%s1 + $0x1d0] sm:$0xff]
  %v77 = vld [vmem:[%s1 + $0x1d8] sm:$0xff]
  %v78 = vld [vmem:[%s1 + $0x1e0] sm:$0xff]
  %v79 = vld [vmem:[%s1 + $0x1e8] sm:$0xff]
  %v80 = vld [vmem:[%s1 + $0x1f0] sm:$0xff]
  %v81 = vld [vmem:[%s1 + $0x1f8] sm:$0xff]
  %v82 = vld [vmem:[%s1 + $0x200] sm:$0xff]
  %v83 = vld [vmem:[%s1 + $0x208] sm:$0xff]
  %v84 = vld [vmem:[%s1 + $0x210] sm:$0xff]
  %v85 = vld [vmem:[%s1 + $0x218] sm:$0xff]
  %v86 = vld [vmem:[%s1 + $0x220] sm:$0xff]
  %v87 = vld [vmem:[%s1 + $0x228] sm:$0xff]
  %v88 = vld [vmem:[%s1 + $0x230] sm:$0xff]
  %v89 = vld [vmem:[%s1 + $0x238] sm:$0xff]
  %v90 = vld [vmem:[%s1 + $0x240] sm:$0xff]
  %v91 = vld [vmem:[%s1 + $0x248] sm:$0xff]
  %v92 = vld [vmem:[%s1 + $0x250] sm:$0xff]
  %v93 = vld [vmem:[%s1 + $0x258] sm:$0xff]
  %v94 = vld [vmem:[%s1 + $0x260] sm:$0xff]
  %v95 = vld [vmem:[%s1 + $0x268] sm:$0xff]
  %v96 = vld [vmem:[%s1 + $0x270] sm:$0xff]
  %v97 = vld [vmem:[%s1 + $0x278] sm:$0xff]
  %v98 = vld [vmem:[%s1 + $0x280] sm:$0xff]
  %v99 = vld [vmem:[%s1 + $0x288] sm:$0xff]
  %v100 = vld [vmem:[%s1 + $0x290] sm:$0xff]
  %v101 = vld [vmem:[%s1 + $0x298] sm:$0xff]
  %v102 = vld [vmem:[%s1 + $0x2a0] sm:$0xff]
  %v103 = vld [vmem:[%s1 + $0x2a8] sm:$0xff]
  %v104 = vld [vmem:[%s1 + $0x2b0] sm:$0xff]
  %v105 = vld [vmem:[%s1 + $0x2b8] sm:$0xff]
  %v106 = vld [vmem:[%s1 + $0x2c0] sm:$0xff]
  %v107 = vld [vmem:[%s1 + $0x2c8] sm:$0xff]
  %v108 = vld [vmem:[%s1 + $0x2d0] sm:$0xff]
  %v109 = vld [vmem:[%s1 + $0x2d8] sm:$0xff]
  %v110 = vld [vmem:[%s1 + $0x2e0] sm:$0xff]
  %v111 = vld [vmem:[%s1 + $0x2e8] sm:$0xff]
  %v112 = vld [vmem:[%s1 + $0x2f0] sm:$0xff]
  %v113 = vld [vmem:[%s1 + $0x2f8] sm:$0xff]
  %v114 = vld [vmem:[%s1 + $0x300] sm:$0xff]
  %v115 = vld [vmem:[%s1 + $0x308] sm:$0xff]
  %v116 = vld [vmem:[%s1 + $0x310] sm:$0xff]
  %v117 = vld [vmem:[%s1 + $0x318] sm:$0xff]
  %v118 = vld [vmem:[%s1 + $0x320] sm:$0xff]
  %v119 = vld [vmem:[%s1 + $0x328] sm:$0xff]
  %v120 = vld [vmem:[%s1 + $0x330] sm:$0xff]
  %v121 = vld [vmem:[%s1 + $0x338] sm:$0xff]
  %v122 = vld [vmem:[%s1 + $0x340] sm:$0xff]
  %v123 = vld [vmem:[%s1 + $0x348] sm:$0xff]
  %v124 = vld [vmem:[%s1 + $0x350] sm:$0xff]
  %v125 = vld [vmem:[%s1 + $0x358] sm:$0xff]
  %v126 = vld [vmem:[%s1 + $0x360] sm:$0xff]
  %v127 = vld [vmem:[%s1 + $0x368] sm:$0xff]
  %v128 = vld [vmem:[%s1 + $0x370] sm:$0xff]
  %v129 = vld [vmem:[%s1 + $0x378] sm:$0xff]
  %v130 = vld [vmem:[%s1 + $0x380] sm:$0xff]
  %v131 = vld [vmem:[%s1 + $0x388] sm:$0xff]
  %v132 = vld [vmem:[%s1 + $0x390] sm:$0xff]
  %v133 = vld [vmem:[%s1 + $0x398] sm:$0xff]
  %v134 = vld [vmem:[%s1 + $0x3a0] sm:$0xff]
  %v135 = vld [vmem:[%s1 + $0x3a8] sm:$0xff]
  %v136 = vld [vmem:[%s1 + $0x3b0] sm:$0xff]
  %v137 = vld [vmem:[%s1 + $0x3b8] sm:$0xff]
  %v138 = vld [vmem:[%s1 + $0x3c0] sm:$0xff]
  %v139 = vld [vmem:[%s1 + $0x3c8] sm:$0xff]
  %v140 = vld [vmem:[%s1 + $0x3d0] sm:$0xff]
  %v141 = vld [vmem:[%s1 + $0x3d8] sm:$0xff]
  %v142 = vld [vmem:[%s1 + $0x3e0] sm:$0xff]
  %v143 = vld [vmem:[%s1 + $0x3e8] sm:$0xff]
  %v144 = vld [vmem:[%s1 + $0x3f0] sm:$0xff]
  %v145 = vld [vmem:[%s1 + $0x3f8] sm:$0xff]
  %v146 = vld [vmem:[%s1 + $0x400] sm:$0xff]
  %v147 = vld [vmem:[%s1 + $0x408] sm:$0xff]
  %v148 = vld [vmem:[%s1 + $0x410] sm:$0xff]
  %v149 = vld [vmem:[%s1 + $0x418] sm:$0xff]
  %v150 = vld [vmem:[%s1 + $0x420] sm:$0xff]
  %v151 = vld [vmem:[%s1 + $0x428] sm:$0xff]
  %v152 = vld [vmem:[%s1 + $0x430] sm:$0xff]
  %v153 = vld [vmem:[%s1 + $0x438] sm:$0xff]
  %v154 = vld [vmem:[%s1 + $0x440] sm:$0xff]
  %v155 = vld [vmem:[%s1 + $0x448] sm:$0xff]
  %v156 = vld [vmem:[%s1 + $0x450] sm:$0xff]
  %v157 = vld [vmem:[%s1 + $0x458] sm:$0xff]
  %v158 = vld [vmem:[%s1 + $0x460] sm:$0xff]
  %v159 = vld [vmem:[%s1 + $0x468] sm:$0xff]
  %v160 = vld [vmem:[%s1 + $0x470] sm:$0xff]
  %v161 = vld [vmem:[%s1 + $0x478] sm:$0xff]
  %v162 = vld [vmem:[%s1 + $0x480] sm:$0xff]
  %v163 = vld [vmem:[%s1 + $0x488] sm:$0xff]
  %v164 = vld [vmem:[%s1 + $0x490] sm:$0xff]
  %v165 = vld [vmem:[%s1 + $0x498] sm:$0xff]
  %v166 = vld [vmem:[%s1 + $0x4a0] sm:$0xff]
  %v167 = vld [vmem:[%s1 + $0x4a8] sm:$0xff]
  %v168 = vld [vmem:[%s1 + $0x4b0] sm:$0xff]
  %v169 = vld [vmem:[%s1 + $0x4b8] sm:$0xff]
  %v170 = vld [vmem:[%s1 + $0x4c0] sm:$0xff]
  %v171 = vld [vmem:[%s1 + $0x4c8] sm:$0xff]
  %v172 = vld [vmem:[%s1 + $0x4d0] sm:$0xff]
  %v173 = vld [vmem:[%s1 + $0x4d8] sm:$0xff]
  %v174 = vld [vmem:[%s1 + $0x4e0] sm:$0xff]
  %v175 = vld [vmem:[%s1 + $0x4e8] sm:$0xff]
  %v176 = vld [vmem:[%s1 + $0x4f0] sm:$0xff]
  %v177 = vld [vmem:[%s1 + $0x4f8] sm:$0xff]
  %v178 = vld [vmem:[%s1 + $0x500] sm:$0xff]
  %v179 = vld [vmem:[%s1 + $0x508] sm:$0xff]
  %v180 = vld [vmem:[%s1 + $0x510] sm:$0xff]
  %v181 = vld [vmem:[%s1 + $0x518] sm:$0xff]
  %v182 = vld [vmem:[%s1 + $0x520] sm:$0xff]
  %v183 = vld [vmem:[%s1 + $0x528] sm:$0xff]
  %v184 = vld [vmem:[%s1 + $0x530] sm:$0xff]
  %v185 = vld [vmem:[%s1 + $0x538] sm:$0xff]
  %v186 = vld [vmem:[%s1 + $0x540] sm:$0xff]
  %v187 = vld [vmem:[%s1 + $0x548] sm:$0xff]
  %v188 = vld [vmem:[%s1 + $0x550] sm:$0xff]
  %v189 = vld [vmem:[%s1 + $0x558] sm:$0xff]
  %v190 = vld [vmem:[%s1 + $0x560] sm:$0xff]
  %v191 = vld [vmem:[%s1 + $0x568] sm:$0xff]
  %v192 = vld [vmem:[%s1 + $0x570] sm:$0xff]
  %v193 = vld [vmem:[%s1 + $0x578] sm:$0xff]
  %v194 = vld [vmem:[%s1 + $0x580] sm:$0xff]
  %v195 = vld [vmem:[%s1 + $0x588] sm:$0xff]
  %v196 = vld [vmem:[%s1 + $0x590] sm:$0xff]
  %v197 = vld [vmem:[%s1 + $0x598] sm:$0xff]
  %v198 = vld [vmem:[%s1 + $0x5a0] sm:$0xff]
  %v199 = vld [vmem:[%s1 + $0x5a8] sm:$0xff]
  %v200 = vld [vmem:[%s1 + $0x5b0] sm:$0xff]
  %v201 = vld [vmem:[%s1 + $0x5b8] sm:$0xff]
  %v202 = vld [vmem:[%s1 + $0x5c0] sm:$0xff]
  %v203 = vld [vmem:[%s1 + $0x5c8] sm:$0xff]
  %v204 = vld [vmem:[%s1 + $0x5d0] sm:$0xff]
  %v205 = vld [vmem:[%s1 + $0x5d8] sm:$0xff]
  %v206 = vld [vmem:[%s1 + $0x5e0] sm:$0xff]
  %v207 = vld [vmem:[%s1 + $0x5e8] sm:$0xff]
  %v208 = vld [vmem:[%s1 + $0x5f0] sm:$0xff]
  %v209 = vld [vmem:[%s1 + $0x5f8] sm:$0xff]
  %v210 = vld [vmem:[%s2] sm:$0xff]
  %212 = vset.pattern.permute.xlu0 0
  %213 = vperm.xlu0 %212, %v210
  %v214 = vpop.permute.xlu0 %213
  %216 = vmatpush.msra.mxu0 %v63
  %217 = vmatpush.msra.mxu0 %v60
  %218 = vmatpush.msra.mxu0 %v57
  %219 = vmatpush.msra.mxu0 %v54
  %220 = vmatpush.msra.mxu0 %v51
  %221 = vmatpush.msra.mxu0 %v48
  %222 = vmatpush.msra.mxu0 %v45
  %223 = vmatpush.msra.mxu0 %v42
  %224 = vmatpush.msra.mxu0 %v39
  %225 = vmatpush.msra.mxu0 %v36
  %226 = vmatpush.msra.mxu0 %v33
  %227 = vmatpush.msra.mxu0 %v30
  %228 = vmatpush.msra.mxu0 %v27
  %229 = vmatpush.msra.mxu0 %v24
  %230 = vmatpush.msra.mxu0 %v21
  %231 = vmatpush.msra.mxu0 %v18
  %232 = vmatmul.f32.gmra.mxu0 %v14
  %v233 = vpop.f32.mrf.mxu0
  %v234 = vadd.f32 %v214, %v233
  %235 = vdwg.mxu0
  %236 = vmatpush.msra.mxu0 %v111
  %237 = vmatpush.msra.mxu0 %v108
  %238 = vmatpush.msra.mxu0 %v105
  %239 = vmatpush.msra.mxu0 %v102
  %240 = vmatpush.msra.mxu0 %v99
  %241 = vmatpush.msra.mxu0 %v96
  %242 = vmatpush.msra.mxu0 %v93
  %243 = vmatpush.msra.mxu0 %v90
  %244 = vmatpush.msra.mxu0 %v87
  %245 = vmatpush.msra.mxu0 %v84
  %246 = vmatpush.msra.mxu0 %v81
  %247 = vmatpush.msra.mxu0 %v78
  %248 = vmatpush.msra.mxu0 %v75
  %249 = vmatpush.msra.mxu0 %v72
  %250 = vmatpush.msra.mxu0 %v69
  %251 = vmatpush.msra.mxu0 %v66
  %252 = vmatmul.f32.gmra.mxu0 %v15
  %v253 = vpop.f32.mrf.mxu0
  %v254 = vadd.f32 %v234, %v253
  %255 = vdwg.mxu0
  %256 = vmatpush.msra.mxu0 %v159
  %257 = vmatpush.msra.mxu0 %v156
  %258 = vmatpush.msra.mxu0 %v153
  %259 = vmatpush.msra.mxu0 %v150
  %260 = vmatpush.msra.mxu0 %v147
  %261 = vmatpush.msra.mxu0 %v144
  %262 = vmatpush.msra.mxu0 %v141
  %263 = vmatpush.msra.mxu0 %v138
  %264 = vmatpush.msra.mxu0 %v135
  %265 = vmatpush.msra.mxu0 %v132
  %266 = vmatpush.msra.mxu0 %v129
  %267 = vmatpush.msra.mxu0 %v126
  %268 = vmatpush.msra.mxu0 %v123
  %269 = vmatpush.msra.mxu0 %v120
  %270 = vmatpush.msra.mxu0 %v117
  %271 = vmatpush.msra.mxu0 %v114
  %272 = vmatmul.f32.gmra.mxu0 %v16
  %v273 = vpop.f32.mrf.mxu0
  %v274 = vadd.f32 %v254, %v273
  %275 = vdwg.mxu0
  %276 = vmatpush.msra.mxu0 %v207
  %277 = vmatpush.msra.mxu0 %v204
  %278 = vmatpush.msra.mxu0 %v201
  %279 = vmatpush.msra.mxu0 %v198
  %280 = vmatpush.msra.mxu0 %v195
  %281 = vmatpush.msra.mxu0 %v192
  %282 = vmatpush.msra.mxu0 %v189
  %283 = vmatpush.msra.mxu0 %v186
  %284 = vmatpush.msra.mxu0 %v183
  %285 = vmatpush.msra.mxu0 %v180
  %286 = vmatpush.msra.mxu0 %v177
  %287 = vmatpush.msra.mxu0 %v174
  %288 = vmatpush.msra.mxu0 %v171
  %289 = vmatpush.msra.mxu0 %v168
  %290 = vmatpush.msra.mxu0 %v165
  %291 = vmatpush.msra.mxu0 %v162
  %292 = vmatmul.f32.gmra.mxu0 %v17
  %v293 = vpop.f32.mrf.mxu0
  %v294 = vadd.f32 %v274, %v293
  %295 = vdwg.mxu0
  %296 = vmatpush.msra.mxu0 %v64
  %297 = vmatpush.msra.mxu0 %v61
  %298 = vmatpush.msra.mxu0 %v58
  %299 = vmatpush.msra.mxu0 %v55
  %300 = vmatpush.msra.mxu0 %v52
  %301 = vmatpush.msra.mxu0 %v49
  %302 = vmatpush.msra.mxu0 %v46
  %303 = vmatpush.msra.mxu0 %v43
  %304 = vmatpush.msra.mxu0 %v40
  %305 = vmatpush.msra.mxu0 %v37
  %306 = vmatpush.msra.mxu0 %v34
  %307 = vmatpush.msra.mxu0 %v31
  %308 = vmatpush.msra.mxu0 %v28
  %309 = vmatpush.msra.mxu0 %v25
  %310 = vmatpush.msra.mxu0 %v22
  %311 = vmatpush.msra.mxu0 %v19
  %312 = vmatmul.f32.gmra.mxu0 %v14
  %v313 = vpop.f32.mrf.mxu0
  %v314 = vadd.f32 %v214, %v313
  %315 = vdwg.mxu0
  %316 = vmatpush.msra.mxu0 %v112
  %317 = vmatpush.msra.mxu0 %v109
  %318 = vmatpush.msra.mxu0 %v106
  %319 = vmatpush.msra.mxu0 %v103
  %320 = vmatpush.msra.mxu0 %v100
  %321 = vmatpush.msra.mxu0 %v97
  %322 = vmatpush.msra.mxu0 %v94
  %323 = vmatpush.msra.mxu0 %v91
  %324 = vmatpush.msra.mxu0 %v88
  %325 = vmatpush.msra.mxu0 %v85
  %326 = vmatpush.msra.mxu0 %v82
  %327 = vmatpush.msra.mxu0 %v79
  %328 = vmatpush.msra.mxu0 %v76
  %329 = vmatpush.msra.mxu0 %v73
  %330 = vmatpush.msra.mxu0 %v70
  %331 = vmatpush.msra.mxu0 %v67
  %332 = vmatmul.f32.gmra.mxu0 %v15
  %v333 = vpop.f32.mrf.mxu0
  %v334 = vadd.f32 %v314, %v333
  %335 = vdwg.mxu0
  %336 = vmatpush.msra.mxu0 %v160
  %337 = vmatpush.msra.mxu0 %v157
  %338 = vmatpush.msra.mxu0 %v154
  %339 = vmatpush.msra.mxu0 %v151
  %340 = vmatpush.msra.mxu0 %v148
  %341 = vmatpush.msra.mxu0 %v145
  %342 = vmatpush.msra.mxu0 %v142
  %343 = vmatpush.msra.mxu0 %v139
  %344 = vmatpush.msra.mxu0 %v136
  %345 = vmatpush.msra.mxu0 %v133
  %346 = vmatpush.msra.mxu0 %v130
  %347 = vmatpush.msra.mxu0 %v127
  %348 = vmatpush.msra.mxu0 %v124
  %349 = vmatpush.msra.mxu0 %v121
  %350 = vmatpush.msra.mxu0 %v118
  %351 = vmatpush.msra.mxu0 %v115
  %352 = vmatmul.f32.gmra.mxu0 %v16
  %v353 = vpop.f32.mrf.mxu0
  %v354 = vadd.f32 %v334, %v353
  %355 = vdwg.mxu0
  %356 = vmatpush.msra.mxu0 %v208
  %357 = vmatpush.msra.mxu0 %v205
  %358 = vmatpush.msra.mxu0 %v202
  %359 = vmatpush.msra.mxu0 %v199
  %360 = vmatpush.msra.mxu0 %v196
  %361 = vmatpush.msra.mxu0 %v193
  %362 = vmatpush.msra.mxu0 %v190
  %363 = vmatpush.msra.mxu0 %v187
  %364 = vmatpush.msra.mxu0 %v184
  %365 = vmatpush.msra.mxu0 %v181
  %366 = vmatpush.msra.mxu0 %v178
  %367 = vmatpush.msra.mxu0 %v175
  %368 = vmatpush.msra.mxu0 %v172
  %369 = vmatpush.msra.mxu0 %v169
  %370 = vmatpush.msra.mxu0 %v166
  %371 = vmatpush.msra.mxu0 %v163
  %372 = vmatmul.f32.gmra.mxu0 %v17
  %v373 = vpop.f32.mrf.mxu0
  %v374 = vadd.f32 %v354, %v373
  %375 = vdwg.mxu0
  %376 = vmatpush.msra.mxu0 %v65
  %377 = vmatpush.msra.mxu0 %v62
  %378 = vmatpush.msra.mxu0 %v59
  %379 = vmatpush.msra.mxu0 %v56
  %380 = vmatpush.msra.mxu0 %v53
  %381 = vmatpush.msra.mxu0 %v50
  %382 = vmatpush.msra.mxu0 %v47
  %383 = vmatpush.msra.mxu0 %v44
  %384 = vmatpush.msra.mxu0 %v41
  %385 = vmatpush.msra.mxu0 %v38
  %386 = vmatpush.msra.mxu0 %v35
  %387 = vmatpush.msra.mxu0 %v32
  %388 = vmatpush.msra.mxu0 %v29
  %389 = vmatpush.msra.mxu0 %v26
  %390 = vmatpush.msra.mxu0 %v23
  %391 = vmatpush.msra.mxu0 %v20
  %392 = vmatmul.f32.gmra.mxu0 %v14
  %v393 = vpop.f32.mrf.mxu0
  %v394 = vadd.f32 %v214, %v393
  %395 = vdwg.mxu0
  %396 = vmatpush.msra.mxu0 %v113
  %397 = vmatpush.msra.mxu0 %v110
  %398 = vmatpush.msra.mxu0 %v107
  %399 = vmatpush.msra.mxu0 %v104
  %400 = vmatpush.msra.mxu0 %v101
  %401 = vmatpush.msra.mxu0 %v98
  %402 = vmatpush.msra.mxu0 %v95
  %403 = vmatpush.msra.mxu0 %v92
  %404 = vmatpush.msra.mxu0 %v89
  %405 = vmatpush.msra.mxu0 %v86
  %406 = vmatpush.msra.mxu0 %v83
  %407 = vmatpush.msra.mxu0 %v80
  %408 = vmatpush.msra.mxu0 %v77
  %409 = vmatpush.msra.mxu0 %v74
  %410 = vmatpush.msra.mxu0 %v71
  %411 = vmatpush.msra.mxu0 %v68
  %412 = vmatmul.f32.gmra.mxu0 %v15
  %v413 = vpop.f32.mrf.mxu0
  %v414 = vadd.f32 %v394, %v413
  %415 = vdwg.mxu0
  %416 = vmatpush.msra.mxu0 %v161
  %417 = vmatpush.msra.mxu0 %v158
  %418 = vmatpush.msra.mxu0 %v155
  %419 = vmatpush.msra.mxu0 %v152
  %420 = vmatpush.msra.mxu0 %v149
  %421 = vmatpush.msra.mxu0 %v146
  %422 = vmatpush.msra.mxu0 %v143
  %423 = vmatpush.msra.mxu0 %v140
  %424 = vmatpush.msra.mxu0 %v137
  %425 = vmatpush.msra.mxu0 %v134
  %426 = vmatpush.msra.mxu0 %v131
  %427 = vmatpush.msra.mxu0 %v128
  %428 = vmatpush.msra.mxu0 %v125
  %429 = vmatpush.msra.mxu0 %v122
  %430 = vmatpush.msra.mxu0 %v119
  %431 = vmatpush.msra.mxu0 %v116
  %432 = vmatmul.f32.gmra.mxu0 %v16
  %v433 = vpop.f32.mrf.mxu0
  %v434 = vadd.f32 %v414, %v433
  %435 = vdwg.mxu0
  %436 = vmatpush.msra.mxu0 %v209
  %437 = vmatpush.msra.mxu0 %v206
  %438 = vmatpush.msra.mxu0 %v203
  %439 = vmatpush.msra.mxu0 %v200
  %440 = vmatpush.msra.mxu0 %v197
  %441 = vmatpush.msra.mxu0 %v194
  %442 = vmatpush.msra.mxu0 %v191
  %443 = vmatpush.msra.mxu0 %v188
  %444 = vmatpush.msra.mxu0 %v185
  %445 = vmatpush.msra.mxu0 %v182
  %446 = vmatpush.msra.mxu0 %v179
  %447 = vmatpush.msra.mxu0 %v176
  %448 = vmatpush.msra.mxu0 %v173
  %449 = vmatpush.msra.mxu0 %v170
  %450 = vmatpush.msra.mxu0 %v167
  %451 = vmatpush.msra.mxu0 %v164
  %452 = vmatmul.f32.gmra.mxu0 %v17
  %v453 = vpop.f32.mrf.mxu0
  %v454 = vadd.f32 %v434, %v453
  %455 = vdwg.mxu0
  %v456 = vtanh.pop %v294
  %v457 = vtanh.pop %v374
  %v458 = vtanh.pop %v454
  %459 = vst [vmem:[%s3] sm:$0xff] %v456
  %460 = vst [vmem:[%s3 + $0x8] sm:$0xff] %v457
  %461 = vst [vmem:[%s3 + $0x10] sm:$0xff] %v458
  // Predicated region
  $region14: #{conv2d_tanh.1} parent=0 // pred_check
    _
  $region15: #{conv2d_tanh.1} parent=0 // pred_check_branch
    %463 = sbr.rel (0) target = $region17
  $region16: #{conv2d_tanh.1} parent=0 // pred_region
    _
  $region17: #{conv2d_tanh.1} parent=0 // pred_fallthru
    _
  // Predicated region
  $region18: #{conv2d_tanh.1} parent=0 // pred_check
    _
  $region19: #{conv2d_tanh.1} parent=0 // pred_check_branch
    %465 = sbr.rel (0) target = $region21
  $region20: #{conv2d_tanh.1} parent=0 // pred_region
    _
  $region21: #{conv2d_tanh.1} parent=0 // pred_fallthru
    _

</llo_original>
